<compile_context>
chip_gen: v7x
topology: tpu7x:2x2x1
jax: 0.10.0
libtpu: 0.0.40
codegen_flags: <defaults>
</compile_context>

<pallas_src>
import functools
import math

import jax
import jax.numpy as jnp
from jax import lax
from jax.experimental import pallas as pl
from jax.experimental.pallas import tpu as pltpu

_LANE_WIDTH = 512          # lane-dense slab width (multiple of 128)
_MAX_BLOCK_ROWS = 256      # (256, 512) f32 block = 512 KiB per buffer

_GOLDEN = 0x9E3779B9
_M1 = 0x7FEB352D
_M2 = 0x846CA68B
_STREAM2 = 0x85EBCA6B


def _mix32(x):
    """murmur/splitmix-style 32-bit avalanche (uint32 in, uint32 out)."""
    x = x ^ (x >> 16)
    x = x * jnp.uint32(_M1)
    x = x ^ (x >> 15)
    x = x * jnp.uint32(_M2)
    x = x ^ (x >> 16)
    return x


def _additive_noise_kernel(seed_ref, x_ref, o_ref, *, sigma, relative_scale):
    blk_rows, blk_cols = x_ref.shape

    # ---- counter-based RNG: unique key per grid tile, unique counter per element.
    pid = pl.program_id(0).astype(jnp.uint32)
    seed = seed_ref[0].astype(jnp.uint32)
    key1 = _mix32(seed + jnp.uint32(_GOLDEN) * (pid + jnp.uint32(1)))
    key2 = _mix32(key1 ^ jnp.uint32(_STREAM2))

    row = lax.broadcasted_iota(jnp.int32, (blk_rows, blk_cols), 0)
    col = lax.broadcasted_iota(jnp.int32, (blk_rows, blk_cols), 1)
    idx = (row * blk_cols + col).astype(jnp.uint32)

    bits1 = _mix32(_mix32(idx ^ key1))
    bits2 = _mix32(_mix32(idx ^ key2))

    # ---- Box-Muller: two uniforms -> one standard normal per element (EUP work).
    inv24 = jnp.float32(1.0 / (1 << 24))
    u1 = ((bits1 >> 8) + jnp.uint32(1)).astype(jnp.float32) * inv24   # (0, 1]
    u2 = (bits2 >> 8).astype(jnp.float32) * inv24                     # [0, 1)
    r = jnp.sqrt(jnp.float32(-2.0) * jnp.log(u1))
    noise = r * jnp.cos(jnp.float32(2.0 * math.pi) * u2)

    # ---- scale & add: compute in f32 in-register, store in the original dtype.
    x = x_ref[...].astype(jnp.float32)
    if relative_scale:
        scale = jnp.float32(sigma) * x          # noise-to-signal preserving
    else:
        scale = jnp.float32(sigma)
    o_ref[...] = (x + noise * scale).astype(o_ref.dtype)


def additive_gaussian_noise(
    x,
    seed: int,
    sigma: float = 0.1,
    relative_scale: bool = True,
    training: bool = True,
    enabled_on_inference: bool = False,
):
    """Forward pass of AdditiveGaussianNoise. `x` is NCHW (or any shape).

    NOTE: the same `seed` yields the same noise; callers should vary it per step.
    """
    if not (training or enabled_on_inference) or sigma == 0.0:
        return x  # identity path, matches the PyTorch module

    orig_shape = x.shape
    orig_dtype = x.dtype

    flat = x.reshape(-1)                        # keep original dtype end-to-end
    n = flat.shape[0]
    pad = (-n) % _LANE_WIDTH
    if pad:                                     # rare path; aligned inputs skip the copy
        flat = jnp.pad(flat, (0, pad))
    rows = flat.shape[0] // _LANE_WIDTH
    x2d = flat.reshape(rows, _LANE_WIDTH)

    block_rows = min(rows, _MAX_BLOCK_ROWS)
    grid = (pl.cdiv(rows, block_rows),)

    itemsize = jnp.dtype(orig_dtype).itemsize
    cost = pl.CostEstimate(
        flops=4 * n,
        transcendentals=3 * n,                  # log, sqrt, cos per element
        bytes_accessed=2 * n * itemsize,
    )

    kernel = functools.partial(
        _additive_noise_kernel, sigma=float(sigma), relative_scale=bool(relative_scale)
    )
    seed_arr = jnp.asarray([seed], dtype=jnp.int32)

    out2d = pl.pallas_call(
        kernel,
        out_shape=jax.ShapeDtypeStruct(x2d.shape, orig_dtype),
        grid=grid,
        in_specs=[
            pl.BlockSpec(memory_space=pltpu.SMEM),                      # seed scalar
            pl.BlockSpec((block_rows, _LANE_WIDTH), lambda i: (i, 0)),  # x tiles
        ],
        out_specs=pl.BlockSpec((block_rows, _LANE_WIDTH), lambda i: (i, 0)),
        compiler_params=pltpu.CompilerParams(
            dimension_semantics=("parallel",),
        ),
        cost_estimate=cost,
    )(seed_arr, x2d)

    out = out2d.reshape(-1)
    if pad:
        out = out[:n]
    return out.reshape(orig_shape)


if __name__ == "__main__":
    root = jax.random.PRNGKey(0)
    k1, k2 = jax.random.split(root)
    sigma = 0.1

    # --- primary case: NCHW conv feature map, aligned (2*4*16*16 = 2048 = 4*512).
    x = jax.random.normal(k1, (2, 4, 16, 16), dtype=jnp.float32)
    y = additive_gaussian_noise(x, seed=123, sigma=sigma, relative_scale=True, training=True)
    y = jax.block_until_ready(y)
    assert y.shape == x.shape and y.dtype == x.dtype

    # out = x * (1 + sigma * z), z ~ N(0,1): recover z and sanity-check its stats.
    delta = y - x
    mask = jnp.abs(x) > 1e-3
    safe_x = jnp.where(mask, x, 1.0)
    z = jnp.where(mask, delta / (sigma * safe_x), 0.0)
    cnt = jnp.sum(mask)
    mean = jnp.sum(z) / cnt
    var = jnp.sum(jnp.where(mask, (z - mean) ** 2, 0.0)) / cnt
    std = jnp.sqrt(var)
    assert float(jnp.max(jnp.abs(delta))) > 0.0
    assert abs(float(mean)) < 0.2, float(mean)
    assert 0.8 < float(std) < 1.2, float(std)
    assert float(jnp.max(jnp.abs(z))) < 6.5

    # --- multi-tile case: exercises grid > 1 and independent per-tile noise.
    xb = jax.random.normal(k2, (8, 32, 32, 32), dtype=jnp.float32)  # 262144 elems -> 2 tiles
    yb = jax.block_until_ready(
        additive_gaussian_noise(xb, seed=7, sigma=sigma, relative_scale=True, training=True)
    )
    zb = ((yb - xb) / (sigma * jnp.where(jnp.abs(xb) > 1e-3, xb, 1.0))).reshape(-1)
    half = zb.shape[0] // 2
    assert not bool(jnp.allclose(zb[:half], zb[half:], atol=1e-3))  # tiles use distinct noise

    # --- unaligned + bf16 case: pad path and dtype preservation.
    xs = jax.random.normal(k2, (3, 5, 7), dtype=jnp.bfloat16)
    ys = jax.block_until_ready(
        additive_gaussian_noise(xs, seed=1, sigma=sigma, relative_scale=True, training=True)
    )
    assert ys.shape == xs.shape and ys.dtype == xs.dtype
    assert bool(jnp.all(jnp.isfinite(ys.astype(jnp.float32))))

    # --- eval-mode identity path.
    y_eval = additive_gaussian_noise(x, seed=0, sigma=sigma, training=False)
    assert bool(jnp.all(y_eval == x))

    print("KERNEL_OK")
</pallas_src>

<mosaic_0001>
module attributes {stable_mosaic.version = 11 : i64} {
  func.func @_additive_noise_kernel(%arg0: i32, %arg1: memref<1xi32, #tpu.memory_space<smem>>, %arg2: memref<4x512xf32, #tpu.memory_space<vmem>>, %arg3: memref<4x512xf32, #tpu.memory_space<vmem>>) attributes {dimension_semantics = [#tpu.dimension_semantics<parallel>], iteration_bounds = array<i64: 1>, scalar_prefetch = 0 : i64, scratch_operands = 0 : i64, tpu.core_type = #tpu.core_type<tc>, window_params = [{transform_indices = @transform_0, window_bounds = array<i64: 1>}, {transform_indices = @transform_1, window_bounds = array<i64: 4, 512>}, {transform_indices = @transform_2, window_bounds = array<i64: 4, 512>}]} {
    %c0 = arith.constant 0 : index
    %0 = memref.load %arg1[%c0] : memref<1xi32, #tpu.memory_space<smem>>
    %c1_i32 = arith.constant 1 : i32
    %1 = arith.addi %arg0, %c1_i32 : i32
    %c-1640531527_i32 = arith.constant -1640531527 : i32
    %2 = arith.muli %c-1640531527_i32, %1 : i32
    %3 = arith.addi %0, %2 : i32
    %c16_i32 = arith.constant 16 : i32
    %4 = arith.shrui %3, %c16_i32 : i32
    %5 = arith.xori %3, %4 : i32
    %c2146121005_i32 = arith.constant 2146121005 : i32
    %6 = arith.muli %5, %c2146121005_i32 : i32
    %c15_i32 = arith.constant 15 : i32
    %7 = arith.shrui %6, %c15_i32 : i32
    %8 = arith.xori %6, %7 : i32
    %c-2073254261_i32 = arith.constant -2073254261 : i32
    %9 = arith.muli %8, %c-2073254261_i32 : i32
    %c16_i32_0 = arith.constant 16 : i32
    %10 = arith.shrui %9, %c16_i32_0 : i32
    %11 = arith.xori %9, %10 : i32
    %c-2048144789_i32 = arith.constant -2048144789 : i32
    %12 = arith.xori %11, %c-2048144789_i32 : i32
    %c16_i32_1 = arith.constant 16 : i32
    %13 = arith.shrui %12, %c16_i32_1 : i32
    %14 = arith.xori %12, %13 : i32
    %c2146121005_i32_2 = arith.constant 2146121005 : i32
    %15 = arith.muli %14, %c2146121005_i32_2 : i32
    %c15_i32_3 = arith.constant 15 : i32
    %16 = arith.shrui %15, %c15_i32_3 : i32
    %17 = arith.xori %15, %16 : i32
    %c-2073254261_i32_4 = arith.constant -2073254261 : i32
    %18 = arith.muli %17, %c-2073254261_i32_4 : i32
    %c16_i32_5 = arith.constant 16 : i32
    %19 = arith.shrui %18, %c16_i32_5 : i32
    %20 = arith.xori %18, %19 : i32
    %21 = tpu.iota {dimensions = array<i32: 0>} : vector<4x512xi32>
    %22 = tpu.iota {dimensions = array<i32: 1>} : vector<4x512xi32>
    %c512_i32 = arith.constant 512 : i32
    %23 = vector.broadcast %c512_i32 : i32 to vector<4x512xi32>
    %24 = arith.muli %21, %23 : vector<4x512xi32>
    %25 = arith.addi %24, %22 : vector<4x512xi32>
    %26 = vector.broadcast %11 : i32 to vector<4x512xi32>
    %27 = arith.xori %25, %26 : vector<4x512xi32>
    %c16_i32_6 = arith.constant 16 : i32
    %28 = vector.broadcast %c16_i32_6 : i32 to vector<4x512xi32>
    %29 = arith.shrui %27, %28 : vector<4x512xi32>
    %30 = arith.xori %27, %29 : vector<4x512xi32>
    %c2146121005_i32_7 = arith.constant 2146121005 : i32
    %31 = vector.broadcast %c2146121005_i32_7 : i32 to vector<4x512xi32>
    %32 = arith.muli %30, %31 : vector<4x512xi32>
    %c15_i32_8 = arith.constant 15 : i32
    %33 = vector.broadcast %c15_i32_8 : i32 to vector<4x512xi32>
    %34 = arith.shrui %32, %33 : vector<4x512xi32>
    %35 = arith.xori %32, %34 : vector<4x512xi32>
    %c-2073254261_i32_9 = arith.constant -2073254261 : i32
    %36 = vector.broadcast %c-2073254261_i32_9 : i32 to vector<4x512xi32>
    %37 = arith.muli %35, %36 : vector<4x512xi32>
    %c16_i32_10 = arith.constant 16 : i32
    %38 = vector.broadcast %c16_i32_10 : i32 to vector<4x512xi32>
    %39 = arith.shrui %37, %38 : vector<4x512xi32>
    %40 = arith.xori %37, %39 : vector<4x512xi32>
    %c16_i32_11 = arith.constant 16 : i32
    %41 = vector.broadcast %c16_i32_11 : i32 to vector<4x512xi32>
    %42 = arith.shrui %40, %41 : vector<4x512xi32>
    %43 = arith.xori %40, %42 : vector<4x512xi32>
    %c2146121005_i32_12 = arith.constant 2146121005 : i32
    %44 = vector.broadcast %c2146121005_i32_12 : i32 to vector<4x512xi32>
    %45 = arith.muli %43, %44 : vector<4x512xi32>
    %c15_i32_13 = arith.constant 15 : i32
    %46 = vector.broadcast %c15_i32_13 : i32 to vector<4x512xi32>
    %47 = arith.shrui %45, %46 : vector<4x512xi32>
    %48 = arith.xori %45, %47 : vector<4x512xi32>
    %c-2073254261_i32_14 = arith.constant -2073254261 : i32
    %49 = vector.broadcast %c-2073254261_i32_14 : i32 to vector<4x512xi32>
    %50 = arith.muli %48, %49 : vector<4x512xi32>
    %c16_i32_15 = arith.constant 16 : i32
    %51 = vector.broadcast %c16_i32_15 : i32 to vector<4x512xi32>
    %52 = arith.shrui %50, %51 : vector<4x512xi32>
    %53 = arith.xori %50, %52 : vector<4x512xi32>
    %54 = vector.broadcast %20 : i32 to vector<4x512xi32>
    %55 = arith.xori %25, %54 : vector<4x512xi32>
    %c16_i32_16 = arith.constant 16 : i32
    %56 = vector.broadcast %c16_i32_16 : i32 to vector<4x512xi32>
    %57 = arith.shrui %55, %56 : vector<4x512xi32>
    %58 = arith.xori %55, %57 : vector<4x512xi32>
    %c2146121005_i32_17 = arith.constant 2146121005 : i32
    %59 = vector.broadcast %c2146121005_i32_17 : i32 to vector<4x512xi32>
    %60 = arith.muli %58, %59 : vector<4x512xi32>
    %c15_i32_18 = arith.constant 15 : i32
    %61 = vector.broadcast %c15_i32_18 : i32 to vector<4x512xi32>
    %62 = arith.shrui %60, %61 : vector<4x512xi32>
    %63 = arith.xori %60, %62 : vector<4x512xi32>
    %c-2073254261_i32_19 = arith.constant -2073254261 : i32
    %64 = vector.broadcast %c-2073254261_i32_19 : i32 to vector<4x512xi32>
    %65 = arith.muli %63, %64 : vector<4x512xi32>
    %c16_i32_20 = arith.constant 16 : i32
    %66 = vector.broadcast %c16_i32_20 : i32 to vector<4x512xi32>
    %67 = arith.shrui %65, %66 : vector<4x512xi32>
    %68 = arith.xori %65, %67 : vector<4x512xi32>
    %c16_i32_21 = arith.constant 16 : i32
    %69 = vector.broadcast %c16_i32_21 : i32 to vector<4x512xi32>
    %70 = arith.shrui %68, %69 : vector<4x512xi32>
    %71 = arith.xori %68, %70 : vector<4x512xi32>
    %c2146121005_i32_22 = arith.constant 2146121005 : i32
    %72 = vector.broadcast %c2146121005_i32_22 : i32 to vector<4x512xi32>
    %73 = arith.muli %71, %72 : vector<4x512xi32>
    %c15_i32_23 = arith.constant 15 : i32
    %74 = vector.broadcast %c15_i32_23 : i32 to vector<4x512xi32>
    %75 = arith.shrui %73, %74 : vector<4x512xi32>
    %76 = arith.xori %73, %75 : vector<4x512xi32>
    %c-2073254261_i32_24 = arith.constant -2073254261 : i32
    %77 = vector.broadcast %c-2073254261_i32_24 : i32 to vector<4x512xi32>
    %78 = arith.muli %76, %77 : vector<4x512xi32>
    %c16_i32_25 = arith.constant 16 : i32
    %79 = vector.broadcast %c16_i32_25 : i32 to vector<4x512xi32>
    %80 = arith.shrui %78, %79 : vector<4x512xi32>
    %81 = arith.xori %78, %80 : vector<4x512xi32>
    %c8_i32 = arith.constant 8 : i32
    %82 = vector.broadcast %c8_i32 : i32 to vector<4x512xi32>
    %83 = arith.shrui %53, %82 : vector<4x512xi32>
    %c1_i32_26 = arith.constant 1 : i32
    %84 = vector.broadcast %c1_i32_26 : i32 to vector<4x512xi32>
    %85 = arith.addi %83, %84 : vector<4x512xi32>
    %86 = arith.uitofp %85 : vector<4x512xi32> to vector<4x512xf32>
    %cst = arith.constant 5.96046448E-8 : f32
    %87 = vector.broadcast %cst : f32 to vector<4x512xf32>
    %88 = arith.mulf %86, %87 : vector<4x512xf32>
    %c8_i32_27 = arith.constant 8 : i32
    %89 = vector.broadcast %c8_i32_27 : i32 to vector<4x512xi32>
    %90 = arith.shrui %81, %89 : vector<4x512xi32>
    %91 = arith.uitofp %90 : vector<4x512xi32> to vector<4x512xf32>
    %cst_28 = arith.constant 5.96046448E-8 : f32
    %92 = vector.broadcast %cst_28 : f32 to vector<4x512xf32>
    %93 = arith.mulf %91, %92 : vector<4x512xf32>
    %94 = math.log %88 : vector<4x512xf32>
    %cst_29 = arith.constant -2.000000e+00 : f32
    %95 = vector.broadcast %cst_29 : f32 to vector<4x512xf32>
    %96 = arith.mulf %95, %94 : vector<4x512xf32>
    %97 = math.sqrt %96 : vector<4x512xf32>
    %cst_30 = arith.constant 6.28318548 : f32
    %98 = vector.broadcast %cst_30 : f32 to vector<4x512xf32>
    %99 = arith.mulf %98, %93 : vector<4x512xf32>
    %100 = math.cos %99 : vector<4x512xf32>
    %101 = arith.mulf %97, %100 : vector<4x512xf32>
    %c0_31 = arith.constant 0 : index
    %c0_32 = arith.constant 0 : index
    %102 = vector.load %arg2[%c0_31, %c0_32] : memref<4x512xf32, #tpu.memory_space<vmem>>, vector<4x512xf32>
    %cst_33 = arith.constant 1.000000e-01 : f32
    %103 = vector.broadcast %cst_33 : f32 to vector<4x512xf32>
    %104 = arith.mulf %103, %102 : vector<4x512xf32>
    %105 = arith.mulf %101, %104 : vector<4x512xf32>
    %106 = arith.addf %102, %105 : vector<4x512xf32>
    %c0_34 = arith.constant 0 : index
    %c0_35 = arith.constant 0 : index
    %107 = vector.load %arg3[%c0_34, %c0_35] : memref<4x512xf32, #tpu.memory_space<vmem>>, vector<4x512xf32>
    tpu.vector_store %arg3[%c0_34, %c0_35], %106 {strides = array<i32>} : memref<4x512xf32, #tpu.memory_space<vmem>>, vector<4x512xf32>,
    return
  }
  func.func @transform_0(%arg0: i32) -> i32 {
    %c0_i32 = arith.constant 0 : i32
    %c0_i32_0 = arith.constant 0 : i32
    return %c0_i32 : i32
  }
  func.func @transform_1(%arg0: i32) -> (i32, i32) {
    %c0_i32 = arith.constant 0 : i32
    %c0_i32_0 = arith.constant 0 : i32
    return %arg0, %c0_i32 : i32, i32
  }
  func.func @transform_2(%arg0: i32) -> (i32, i32) {
    %c0_i32 = arith.constant 0 : i32
    %c0_i32_0 = arith.constant 0 : i32
    return %arg0, %c0_i32 : i32, i32
  }
}

</mosaic_0001>

<llo_original>
// kernel: tpu_custom_call.1
$region0: #{tpu_custom_call.1}
  #allocation0 [shape = 'u32[]', space=smem, size = 0x4, offset = 0x4, fixed_abs, tag = 'smem constant byte address 0x4 - core index']
  #allocation1 [shape = 'u32[144,128]{1,0:T(1,128)}', space=vmem, size = 0x12000, scoped, tag = 'internal scratch']
  #allocation2 [shape = 's32[1]{0:T(128)S(6)}', space=smem, size = 0x200, scoped, tag = 'scoped memory for tpu_custom_call.1']
  %s0 = inlined_call_operand.<no memory space> [shape: s32[1], index: 0, kind: input, shape index: {}]
  %s1 = inlined_call_operand.hbm [shape: f32[4,512], index: 1, kind: input, shape index: {}]
  %s2 = inlined_call_operand.hbm [shape: f32[4,512], index: 2, kind: output, shape index: {}]
  %s3 = sld [smem:[#allocation0]]
  $region22: #{tpu_custom_call.1} parent=0
    _
  %s5 = ssub.s32 1, %s3
  %s6 = scalar_select 0, %s5, %s3
  %7 = sst [smem:[#allocation2]] %s0
  $region1: #{tpu_custom_call.1} parent=0
    #allocation3 [shape = 'u8[8192]{0}', space=vmem, size = 0x2000, scoped, tag = 'input window, operand 1, single buffered']
    #allocation4 [shape = 's32[1]{0}', space=sflag, size = 0x4, scoped, tag = 'scoped memory for tpu_custom_call.1']
    #allocation5 [shape = 's32[1]{0}', space=sflag, size = 0x4, scoped, tag = 'scoped memory for tpu_custom_call.1']
    #allocation6 [shape = 'u8[8192]{0}', space=vmem, size = 0x2000, scoped, tag = 'output window, operand 0, single buffered']
    %8 = vsyncpa [#allocation4], 0
    %9 = vsyncpa [#allocation5], 0
    // Predicated region
    $region2: #{tpu_custom_call.1} parent=1 // pred_check
      _
    $region3: #{tpu_custom_call.1} parent=1 // pred_check_branch
      %11 = sbr.rel (0) target = $region5
    $region4: #{tpu_custom_call.1} parent=1 // pred_region
      _
    $region5: #{tpu_custom_call.1} parent=1 // pred_fallthru
      _
    // Predicated region
    $region6: #{tpu_custom_call.1} parent=1 // pred_check
      _
    $region7: #{tpu_custom_call.1} parent=1 // pred_check_branch
      %13 = sbr.rel (0) target = $region9
    $region8: #{tpu_custom_call.1} parent=1 // pred_region
      %s15 = ssub.s32 256, 256
      %16 = vsyncadd [#allocation4], %s15
      %s18 = sshll.u32 [#allocation3], 4
      %s19 = int_to_ptr.vmem [resolvable:$true] %s18
      %21 = dma.hbm_to_vmem [thread:$0]  %s1, 256, %s19, [#allocation4]
    $region9: #{tpu_custom_call.1} parent=1 // pred_fallthru
      _
    // Predicated region
    $region10: #{tpu_custom_call.1} parent=1 // pred_check
      _
    $region11: #{tpu_custom_call.1} parent=1 // pred_check_branch
      %23 = sbr.rel (0) target = $region13
    $region12: #{tpu_custom_call.1} parent=1 // pred_region
      %24 = dma.done [#allocation4], 256
    $region13: #{tpu_custom_call.1} parent=1 // pred_fallthru
      _
    %s25 = sld [smem:[#allocation2]]
    %s26 = sadd.s32 0, 1
    %s27 = smul.u32 %s26, 2654435769
    %s28 = sadd.s32 %s25, %s27
    %s29 = sshrl.u32 %s28, 16
    %s30 = sxor.u32 %s28, %s29
    %s31 = smul.u32 %s30, 2146121005
    %s32 = sshrl.u32 %s31, 15
    %s33 = sxor.u32 %s31, %s32
    %s34 = smul.u32 %s33, 2221713035
    %s35 = sshrl.u32 %s34, 16
    %s36 = sxor.u32 %s34, %s35
    %s37 = sxor.u32 %s36, 2246822507
    %s38 = sshrl.u32 %s37, 16
    %s39 = sxor.u32 %s37, %s38
    %s40 = smul.u32 %s39, 2146121005
    %s41 = sshrl.u32 %s40, 15
    %s42 = sxor.u32 %s40, %s41
    %s43 = smul.u32 %s42, 2221713035
    %s44 = sshrl.u32 %s43, 16
    %s45 = sxor.u32 %s43, %s44
    %v46 = vlaneseq
    %v47 = vshrl.u32 %v46, 7
    %v48 = vlaneseq
    %v49 = vand.u32 %v48, 127
    %v50 = vadd.s32 %v49, 128
    %v51 = vadd.s32 %v49, 256
    %v52 = vadd.s32 %v49, 384
    %v53 = vmul.u32 %v47, 512
    %v54 = vadd.s32 %v53, %v49
    %v55 = vadd.s32 %v53, %v50
    %v56 = vadd.s32 %v53, %v51
    %v57 = vadd.s32 %v53, %v52
    %v58 = vstv %s36
    %v59 = vxor.u32 %v54, %v58
    %v60 = vxor.u32 %v55, %v58
    %v61 = vxor.u32 %v56, %v58
    %v62 = vxor.u32 %v57, %v58
    %v63 = vshrl.u32 %v59, 16
    %v64 = vshrl.u32 %v60, 16
    %v65 = vshrl.u32 %v61, 16
    %v66 = vshrl.u32 %v62, 16
    %v67 = vxor.u32 %v59, %v63
    %v68 = vxor.u32 %v60, %v64
    %v69 = vxor.u32 %v61, %v65
    %v70 = vxor.u32 %v62, %v66
    %v71 = vmul.u32 %v67, 2146121005
    %v72 = vmul.u32 %v68, 2146121005
    %v73 = vmul.u32 %v69, 2146121005
    %v74 = vmul.u32 %v70, 2146121005
    %v75 = vshrl.u32 %v71, 15
    %v76 = vshrl.u32 %v72, 15
    %v77 = vshrl.u32 %v73, 15
    %v78 = vshrl.u32 %v74, 15
    %v79 = vxor.u32 %v71, %v75
    %v80 = vxor.u32 %v72, %v76
    %v81 = vxor.u32 %v73, %v77
    %v82 = vxor.u32 %v74, %v78
    %v83 = vmul.u32 %v79, 2221713035
    %v84 = vmul.u32 %v80, 2221713035
    %v85 = vmul.u32 %v81, 2221713035
    %v86 = vmul.u32 %v82, 2221713035
    %v87 = vshrl.u32 %v83, 16
    %v88 = vshrl.u32 %v84, 16
    %v89 = vshrl.u32 %v85, 16
    %v90 = vshrl.u32 %v86, 16
    %v91 = vxor.u32 %v83, %v87
    %v92 = vxor.u32 %v84, %v88
    %v93 = vxor.u32 %v85, %v89
    %v94 = vxor.u32 %v86, %v90
    %v95 = vshrl.u32 %v91, 16
    %v96 = vshrl.u32 %v92, 16
    %v97 = vshrl.u32 %v93, 16
    %v98 = vshrl.u32 %v94, 16
    %v99 = vxor.u32 %v91, %v95
    %v100 = vxor.u32 %v92, %v96
    %v101 = vxor.u32 %v93, %v97
    %v102 = vxor.u32 %v94, %v98
    %v103 = vmul.u32 %v99, 2146121005
    %v104 = vmul.u32 %v100, 2146121005
    %v105 = vmul.u32 %v101, 2146121005
    %v106 = vmul.u32 %v102, 2146121005
    %v107 = vshrl.u32 %v103, 15
    %v108 = vshrl.u32 %v104, 15
    %v109 = vshrl.u32 %v105, 15
    %v110 = vshrl.u32 %v106, 15
    %v111 = vxor.u32 %v103, %v107
    %v112 = vxor.u32 %v104, %v108
    %v113 = vxor.u32 %v105, %v109
    %v114 = vxor.u32 %v106, %v110
    %v115 = vmul.u32 %v111, 2221713035
    %v116 = vmul.u32 %v112, 2221713035
    %v117 = vmul.u32 %v113, 2221713035
    %v118 = vmul.u32 %v114, 2221713035
    %v119 = vshrl.u32 %v115, 16
    %v120 = vshrl.u32 %v116, 16
    %v121 = vshrl.u32 %v117, 16
    %v122 = vshrl.u32 %v118, 16
    %v123 = vxor.u32 %v115, %v119
    %v124 = vxor.u32 %v116, %v120
    %v125 = vxor.u32 %v117, %v121
    %v126 = vxor.u32 %v118, %v122
    %v127 = vstv %s45
    %v128 = vxor.u32 %v54, %v127
    %v129 = vxor.u32 %v55, %v127
    %v130 = vxor.u32 %v56, %v127
    %v131 = vxor.u32 %v57, %v127
    %v132 = vshrl.u32 %v128, 16
    %v133 = vshrl.u32 %v129, 16
    %v134 = vshrl.u32 %v130, 16
    %v135 = vshrl.u32 %v131, 16
    %v136 = vxor.u32 %v128, %v132
    %v137 = vxor.u32 %v129, %v133
    %v138 = vxor.u32 %v130, %v134
    %v139 = vxor.u32 %v131, %v135
    %v140 = vmul.u32 %v136, 2146121005
    %v141 = vmul.u32 %v137, 2146121005
    %v142 = vmul.u32 %v138, 2146121005
    %v143 = vmul.u32 %v139, 2146121005
    %v144 = vshrl.u32 %v140, 15
    %v145 = vshrl.u32 %v141, 15
    %v146 = vshrl.u32 %v142, 15
    %v147 = vshrl.u32 %v143, 15
    %v148 = vxor.u32 %v140, %v144
    %v149 = vxor.u32 %v141, %v145
    %v150 = vxor.u32 %v142, %v146
    %v151 = vxor.u32 %v143, %v147
    %v152 = vmul.u32 %v148, 2221713035
    %v153 = vmul.u32 %v149, 2221713035
    %v154 = vmul.u32 %v150, 2221713035
    %v155 = vmul.u32 %v151, 2221713035
    %v156 = vshrl.u32 %v152, 16
    %v157 = vshrl.u32 %v153, 16
    %v158 = vshrl.u32 %v154, 16
    %v159 = vshrl.u32 %v155, 16
    %v160 = vxor.u32 %v152, %v156
    %v161 = vxor.u32 %v153, %v157
    %v162 = vxor.u32 %v154, %v158
    %v163 = vxor.u32 %v155, %v159
    %v164 = vshrl.u32 %v160, 16
    %v165 = vshrl.u32 %v161, 16
    %v166 = vshrl.u32 %v162, 16
    %v167 = vshrl.u32 %v163, 16
    %v168 = vxor.u32 %v160, %v164
    %v169 = vxor.u32 %v161, %v165
    %v170 = vxor.u32 %v162, %v166
    %v171 = vxor.u32 %v163, %v167
    %v172 = vmul.u32 %v168, 2146121005
    %v173 = vmul.u32 %v169, 2146121005
    %v174 = vmul.u32 %v170, 2146121005
    %v175 = vmul.u32 %v171, 2146121005
    %v176 = vshrl.u32 %v172, 15
    %v177 = vshrl.u32 %v173, 15
    %v178 = vshrl.u32 %v174, 15
    %v179 = vshrl.u32 %v175, 15
    %v180 = vxor.u32 %v172, %v176
    %v181 = vxor.u32 %v173, %v177
    %v182 = vxor.u32 %v174, %v178
    %v183 = vxor.u32 %v175, %v179
    %v184 = vmul.u32 %v180, 2221713035
    %v185 = vmul.u32 %v181, 2221713035
    %v186 = vmul.u32 %v182, 2221713035
    %v187 = vmul.u32 %v183, 2221713035
    %v188 = vshrl.u32 %v184, 16
    %v189 = vshrl.u32 %v185, 16
    %v190 = vshrl.u32 %v186, 16
    %v191 = vshrl.u32 %v187, 16
    %v192 = vxor.u32 %v184, %v188
    %v193 = vxor.u32 %v185, %v189
    %v194 = vxor.u32 %v186, %v190
    %v195 = vxor.u32 %v187, %v191
    %v196 = vshrl.u32 %v123, 8
    %v197 = vshrl.u32 %v124, 8
    %v198 = vshrl.u32 %v125, 8
    %v199 = vshrl.u32 %v126, 8
    %v200 = vadd.s32 %v196, 1
    %v201 = vadd.s32 %v197, 1
    %v202 = vadd.s32 %v198, 1
    %v203 = vadd.s32 %v199, 1
    %v204 = vshrl.u32 %v200, 16
    %v205 = vand.u32 %v200, 65535
    %v206 = vcvt.s32.f32 %v204
    %v207 = vmul.f32 %v206, 65536.0
    %v208 = vcvt.s32.f32 %v205
    %v209 = vadd.f32 %v207, %v208
    %v210 = vshrl.u32 %v201, 16
    %v211 = vand.u32 %v201, 65535
    %v212 = vcvt.s32.f32 %v210
    %v213 = vmul.f32 %v212, 65536.0
    %v214 = vcvt.s32.f32 %v211
    %v215 = vadd.f32 %v213, %v214
    %v216 = vshrl.u32 %v202, 16
    %v217 = vand.u32 %v202, 65535
    %v218 = vcvt.s32.f32 %v216
    %v219 = vmul.f32 %v218, 65536.0
    %v220 = vcvt.s32.f32 %v217
    %v221 = vadd.f32 %v219, %v220
    %v222 = vshrl.u32 %v203, 16
    %v223 = vand.u32 %v203, 65535
    %v224 = vcvt.s32.f32 %v222
    %v225 = vmul.f32 %v224, 65536.0
    %v226 = vcvt.s32.f32 %v223
    %v227 = vadd.f32 %v225, %v226
    %v228 = vmul.f32 %v209, 5.9604645e-08
    %v229 = vmul.f32 %v215, 5.9604645e-08
    %v230 = vmul.f32 %v221, 5.9604645e-08
    %v231 = vmul.f32 %v227, 5.9604645e-08
    %v232 = vshrl.u32 %v192, 8
    %v233 = vshrl.u32 %v193, 8
    %v234 = vshrl.u32 %v194, 8
    %v235 = vshrl.u32 %v195, 8
    %v236 = vshrl.u32 %v232, 16
    %v237 = vand.u32 %v232, 65535
    %v238 = vcvt.s32.f32 %v236
    %v239 = vmul.f32 %v238, 65536.0
    %v240 = vcvt.s32.f32 %v237
    %v241 = vadd.f32 %v239, %v240
    %v242 = vshrl.u32 %v233, 16
    %v243 = vand.u32 %v233, 65535
    %v244 = vcvt.s32.f32 %v242
    %v245 = vmul.f32 %v244, 65536.0
    %v246 = vcvt.s32.f32 %v243
    %v247 = vadd.f32 %v245, %v246
    %v248 = vshrl.u32 %v234, 16
    %v249 = vand.u32 %v234, 65535
    %v250 = vcvt.s32.f32 %v248
    %v251 = vmul.f32 %v250, 65536.0
    %v252 = vcvt.s32.f32 %v249
    %v253 = vadd.f32 %v251, %v252
    %v254 = vshrl.u32 %v235, 16
    %v255 = vand.u32 %v235, 65535
    %v256 = vcvt.s32.f32 %v254
    %v257 = vmul.f32 %v256, 65536.0
    %v258 = vcvt.s32.f32 %v255
    %v259 = vadd.f32 %v257, %v258
    %v260 = vmul.f32 %v241, 5.9604645e-08
    %v261 = vmul.f32 %v247, 5.9604645e-08
    %v262 = vmul.f32 %v253, 5.9604645e-08
    %v263 = vmul.f32 %v259, 5.9604645e-08
    %v264 = vlog2.pop %v228
    %v265 = vmul.f32 %v264, 0.6931472
    %v266 = vlog2.pop %v229
    %v267 = vmul.f32 %v266, 0.6931472
    %v268 = vlog2.pop %v230
    %v269 = vmul.f32 %v268, 0.6931472
    %v270 = vlog2.pop %v231
    %v271 = vmul.f32 %v270, 0.6931472
    %v272 = vmul.f32 %v265, -2.0
    %v273 = vmul.f32 %v267, -2.0
    %v274 = vmul.f32 %v269, -2.0
    %v275 = vmul.f32 %v271, -2.0
    %v276 = vrsqrt.pop %v272
    %v277 = vmul.f32 %v272, %v276
    %vm278 = vcmp.eq.f32.partialorder %v272, inf
    %v279 = vsel %vm278, %v272, %v277
    %vm280 = vcmp.eq.f32.partialorder %v272, 0.0
    %v281 = vand.u32 %v272, 2147483648
    %v282 = vsel %vm280, %v281, %v279
    %v283 = vrsqrt.pop %v273
    %v284 = vmul.f32 %v273, %v283
    %vm285 = vcmp.eq.f32.partialorder %v273, inf
    %v286 = vsel %vm285, %v273, %v284
    %vm287 = vcmp.eq.f32.partialorder %v273, 0.0
    %v288 = vand.u32 %v273, 2147483648
    %v289 = vsel %vm287, %v288, %v286
    %v290 = vrsqrt.pop %v274
    %v291 = vmul.f32 %v274, %v290
    %vm292 = vcmp.eq.f32.partialorder %v274, inf
    %v293 = vsel %vm292, %v274, %v291
    %vm294 = vcmp.eq.f32.partialorder %v274, 0.0
    %v295 = vand.u32 %v274, 2147483648
    %v296 = vsel %vm294, %v295, %v293
    %v297 = vrsqrt.pop %v275
    %v298 = vmul.f32 %v275, %v297
    %vm299 = vcmp.eq.f32.partialorder %v275, inf
    %v300 = vsel %vm299, %v275, %v298
    %vm301 = vcmp.eq.f32.partialorder %v275, 0.0
    %v302 = vand.u32 %v275, 2147483648
    %v303 = vsel %vm301, %v302, %v300
    %v304 = vmul.f32 %v260, 6.2831855
    %v305 = vmul.f32 %v261, 6.2831855
    %v306 = vmul.f32 %v262, 6.2831855
    %v307 = vmul.f32 %v263, 6.2831855
    %v308 = vand.u32 2147483647, %v304
    %vm309 = vcmp.le.f32.partialorder %v308, 0.7853982
    %vm310 = vcmp.lt.s32.totalorder %v304, 0
    %v311 = vand.u32 %v304, 2139095040
    %v312 = vshrl.u32 %v311, 23
    %v313 = vsub.s32 %v312, 127
    %v314 = vand.u32 2147483647, %v304
    %v315 = vand.u32 %v314, 8388607
    %v316 = vor.u32 %v315, 8388608
    %v317 = vsub.s32 0, %v316
    %v318 = vadd.s32 %v313, 1
    %vm319 = vcmp.gt.s32.totalorder %v318, 0
    %v320 = vsel %vm319, %v318, 0
    %v321 = vshrl.u32 %v320, 5
    %v322 = vand.u32 %v320, 31
    %v323 = vsub.s32 32, %v322
    %v324 = vshrl.u32 683565275, %v323
    %v325 = vshll.u32 683565275, %v322
    %v326 = vshrl.u32 2475754826, %v323
    %v327 = vor.u32 %v325, %v326
    %v328 = vshll.u32 2475754826, %v322
    %v329 = vshrl.u32 2131351028, %v323
    %v330 = vor.u32 %v328, %v329
    %v331 = vshll.u32 2131351028, %v322
    %v332 = vshrl.u32 2102212464, %v323
    %v333 = vor.u32 %v331, %v332
    %v334 = vshll.u32 2102212464, %v322
    %v335 = vshrl.u32 920167782, %v323
    %v336 = vor.u32 %v334, %v335
    %v337 = vshll.u32 920167782, %v322
    %v338 = vshrl.u32 1326507024, %v323
    %v339 = vor.u32 %v337, %v338
    %vm340 = vcmp.lt.s32.totalorder %v321, 1
    %vm341 = vcmp.lt.s32.totalorder %v321, 2
    %vm342 = vcmp.lt.s32.totalorder %v321, 3
    %vm343 = vcmp.lt.s32.totalorder %v321, 4
    %v344 = vsel %vm340, %v324, %v327
    %v345 = vsel %vm343, %v333, 2102212464
    %v346 = vsel %vm342, %v330, %v345
    %v347 = vsel %vm341, %v344, %v346
    %v348 = vsel %vm340, %v327, %v330
    %v349 = vsel %vm343, %v336, 920167782
    %v350 = vsel %vm342, %v333, %v349
    %v351 = vsel %vm341, %v348, %v350
    %v352 = vsel %vm340, %v330, %v333
    %v353 = vsel %vm343, %v339, 1326507024
    %v354 = vsel %vm342, %v336, %v353
    %v355 = vsel %vm341, %v352, %v354
    %v356 = vshll.u32 %v316, 8
    %v357 = vmul.u32.u64.compose %v356, %v355
    %v358 = vextract.low.u32 %v357
    %v359 = vextract.high.u32 %v357
    %v360 = vmul.u32.u64.compose %v356, %v351
    %v361 = vextract.low.u32 %v360
    %v362 = vextract.high.u32 %v360
    %v363 = vmul.u32 %v356, %v347
    %v364 = vadd.s32 %v359, %v361
    %vm365 = vc.u32 %v359, %v361
    %v366 = vadd.s32 %v362, 1
    %v367 = vsel %vm365, %v366, %v362
    %v368 = vadd.s32 %v363, %v367
    %v369 = vadd.s32 %v368, 536870912
    %v370 = vshrl.u32 %v369, 30
    %v371 = vshll.u32 %v370, 30
    %v372 = vsub.s32 %v368, %v371
    %vm373 = vcmp.lt.s32.totalorder %v372, 0
    %v374 = vsub.s32 0, %v372
    %v375 = vsel %vm373, %v374, %v372
    %v376 = vclz %v375
    %v377 = vsub.s32 %v376, 2
    %vm378 = vcmp.gt.s32.totalorder 0, %v377
    %v379 = vsel %vm378, 0, %v377
    %v380 = vsub.s32 32, %v379
    %v381 = vshll.u32 %v372, %v379
    %v382 = vshrl.u32 %v364, %v380
    %v383 = vor.u32 %v381, %v382
    %v384 = vsub.s32 4294967266, %v379
    %v385 = vadd.s32 %v384, 127
    %v386 = vshll.u32 %v385, 23
    %v387 = vor.u32 4788187, %v386
    %v388 = vand.u32 2147483647, %v387
    %v390 = vcvt.s32.f32 %v383
    %v391 = vmul.f32 %v390, %v388
    %v392 = vxor.u32 %v391, 2147483648
    %v393 = vsel %vm310, %v392, %v391
    %v394 = vsub.s32 4, %v370
    %v395 = vsel %vm310, %v394, %v370
    %v396 = vsel %vm309, %v304, %v393
    %v397 = vsel %vm309, 0, %v395
    %v398 = vcosq.f32.pop %v396
    %v399 = vsinq.f32.pop %v396
    %vm400 = vweird.f32 %v304
    %v401 = vand.u32 %v397, 3
    %vm402 = vcmp.lt.s32.totalorder %v401, 2
    %vm403 = vcmp.eq.s32.totalorder %v401, 0
    %v404 = vxor.u32 %v399, 2147483648
    %v405 = vsel %vm403, %v398, %v404
    %vm406 = vcmp.eq.s32.totalorder %v401, 2
    %v407 = vxor.u32 %v398, 2147483648
    %v408 = vsel %vm406, %v407, %v399
    %v409 = vsel %vm402, %v405, %v408
    %v410 = vsel %vm400, nan, %v409
    %v411 = vand.u32 2147483647, %v305
    %vm412 = vcmp.le.f32.partialorder %v411, 0.7853982
    %vm413 = vcmp.lt.s32.totalorder %v305, 0
    %v414 = vand.u32 %v305, 2139095040
    %v415 = vshrl.u32 %v414, 23
    %v416 = vsub.s32 %v415, 127
    %v417 = vand.u32 2147483647, %v305
    %v418 = vand.u32 %v417, 8388607
    %v419 = vor.u32 %v418, 8388608
    %v420 = vsub.s32 0, %v419
    %v421 = vadd.s32 %v416, 1
    %vm422 = vcmp.gt.s32.totalorder %v421, 0
    %v423 = vsel %vm422, %v421, 0
    %v424 = vshrl.u32 %v423, 5
    %v425 = vand.u32 %v423, 31
    %v426 = vsub.s32 32, %v425
    %v427 = vshrl.u32 683565275, %v426
    %v428 = vshll.u32 683565275, %v425
    %v429 = vshrl.u32 2475754826, %v426
    %v430 = vor.u32 %v428, %v429
    %v431 = vshll.u32 2475754826, %v425
    %v432 = vshrl.u32 2131351028, %v426
    %v433 = vor.u32 %v431, %v432
    %v434 = vshll.u32 2131351028, %v425
    %v435 = vshrl.u32 2102212464, %v426
    %v436 = vor.u32 %v434, %v435
    %v437 = vshll.u32 2102212464, %v425
    %v438 = vshrl.u32 920167782, %v426
    %v439 = vor.u32 %v437, %v438
    %v440 = vshll.u32 920167782, %v425
    %v441 = vshrl.u32 1326507024, %v426
    %v442 = vor.u32 %v440, %v441
    %vm443 = vcmp.lt.s32.totalorder %v424, 1
    %vm444 = vcmp.lt.s32.totalorder %v424, 2
    %vm445 = vcmp.lt.s32.totalorder %v424, 3
    %vm446 = vcmp.lt.s32.totalorder %v424, 4
    %v447 = vsel %vm443, %v427, %v430
    %v448 = vsel %vm446, %v436, 2102212464
    %v449 = vsel %vm445, %v433, %v448
    %v450 = vsel %vm444, %v447, %v449
    %v451 = vsel %vm443, %v430, %v433
    %v452 = vsel %vm446, %v439, 920167782
    %v453 = vsel %vm445, %v436, %v452
    %v454 = vsel %vm444, %v451, %v453
    %v455 = vsel %vm443, %v433, %v436
    %v456 = vsel %vm446, %v442, 1326507024
    %v457 = vsel %vm445, %v439, %v456
    %v458 = vsel %vm444, %v455, %v457
    %v459 = vshll.u32 %v419, 8
    %v460 = vmul.u32.u64.compose %v459, %v458
    %v461 = vextract.low.u32 %v460
    %v462 = vextract.high.u32 %v460
    %v463 = vmul.u32.u64.compose %v459, %v454
    %v464 = vextract.low.u32 %v463
    %v465 = vextract.high.u32 %v463
    %v466 = vmul.u32 %v459, %v450
    %v467 = vadd.s32 %v462, %v464
    %vm468 = vc.u32 %v462, %v464
    %v469 = vadd.s32 %v465, 1
    %v470 = vsel %vm468, %v469, %v465
    %v471 = vadd.s32 %v466, %v470
    %v472 = vadd.s32 %v471, 536870912
    %v473 = vshrl.u32 %v472, 30
    %v474 = vshll.u32 %v473, 30
    %v475 = vsub.s32 %v471, %v474
    %vm476 = vcmp.lt.s32.totalorder %v475, 0
    %v477 = vsub.s32 0, %v475
    %v478 = vsel %vm476, %v477, %v475
    %v479 = vclz %v478
    %v480 = vsub.s32 %v479, 2
    %vm481 = vcmp.gt.s32.totalorder 0, %v480
    %v482 = vsel %vm481, 0, %v480
    %v483 = vsub.s32 32, %v482
    %v484 = vshll.u32 %v475, %v482
    %v485 = vshrl.u32 %v467, %v483
    %v486 = vor.u32 %v484, %v485
    %v487 = vsub.s32 4294967266, %v482
    %v488 = vadd.s32 %v487, 127
    %v489 = vshll.u32 %v488, 23
    %v490 = vor.u32 4788187, %v489
    %v491 = vand.u32 2147483647, %v490
    %v493 = vcvt.s32.f32 %v486
    %v494 = vmul.f32 %v493, %v491
    %v495 = vxor.u32 %v494, 2147483648
    %v496 = vsel %vm413, %v495, %v494
    %v497 = vsub.s32 4, %v473
    %v498 = vsel %vm413, %v497, %v473
    %v499 = vsel %vm412, %v305, %v496
    %v500 = vsel %vm412, 0, %v498
    %v501 = vcosq.f32.pop %v499
    %v502 = vsinq.f32.pop %v499
    %vm503 = vweird.f32 %v305
    %v504 = vand.u32 %v500, 3
    %vm505 = vcmp.lt.s32.totalorder %v504, 2
    %vm506 = vcmp.eq.s32.totalorder %v504, 0
    %v507 = vxor.u32 %v502, 2147483648
    %v508 = vsel %vm506, %v501, %v507
    %vm509 = vcmp.eq.s32.totalorder %v504, 2
    %v510 = vxor.u32 %v501, 2147483648
    %v511 = vsel %vm509, %v510, %v502
    %v512 = vsel %vm505, %v508, %v511
    %v513 = vsel %vm503, nan, %v512
    %v514 = vand.u32 2147483647, %v306
    %vm515 = vcmp.le.f32.partialorder %v514, 0.7853982
    %vm516 = vcmp.lt.s32.totalorder %v306, 0
    %v517 = vand.u32 %v306, 2139095040
    %v518 = vshrl.u32 %v517, 23
    %v519 = vsub.s32 %v518, 127
    %v520 = vand.u32 2147483647, %v306
    %v521 = vand.u32 %v520, 8388607
    %v522 = vor.u32 %v521, 8388608
    %v523 = vsub.s32 0, %v522
    %v524 = vadd.s32 %v519, 1
    %vm525 = vcmp.gt.s32.totalorder %v524, 0
    %v526 = vsel %vm525, %v524, 0
    %v527 = vshrl.u32 %v526, 5
    %v528 = vand.u32 %v526, 31
    %v529 = vsub.s32 32, %v528
    %v530 = vshrl.u32 683565275, %v529
    %v531 = vshll.u32 683565275, %v528
    %v532 = vshrl.u32 2475754826, %v529
    %v533 = vor.u32 %v531, %v532
    %v534 = vshll.u32 2475754826, %v528
    %v535 = vshrl.u32 2131351028, %v529
    %v536 = vor.u32 %v534, %v535
    %v537 = vshll.u32 2131351028, %v528
    %v538 = vshrl.u32 2102212464, %v529
    %v539 = vor.u32 %v537, %v538
    %v540 = vshll.u32 2102212464, %v528
    %v541 = vshrl.u32 920167782, %v529
    %v542 = vor.u32 %v540, %v541
    %v543 = vshll.u32 920167782, %v528
    %v544 = vshrl.u32 1326507024, %v529
    %v545 = vor.u32 %v543, %v544
    %vm546 = vcmp.lt.s32.totalorder %v527, 1
    %vm547 = vcmp.lt.s32.totalorder %v527, 2
    %vm548 = vcmp.lt.s32.totalorder %v527, 3
    %vm549 = vcmp.lt.s32.totalorder %v527, 4
    %v550 = vsel %vm546, %v530, %v533
    %v551 = vsel %vm549, %v539, 2102212464
    %v552 = vsel %vm548, %v536, %v551
    %v553 = vsel %vm547, %v550, %v552
    %v554 = vsel %vm546, %v533, %v536
    %v555 = vsel %vm549, %v542, 920167782
    %v556 = vsel %vm548, %v539, %v555
    %v557 = vsel %vm547, %v554, %v556
    %v558 = vsel %vm546, %v536, %v539
    %v559 = vsel %vm549, %v545, 1326507024
    %v560 = vsel %vm548, %v542, %v559
    %v561 = vsel %vm547, %v558, %v560
    %v562 = vshll.u32 %v522, 8
    %v563 = vmul.u32.u64.compose %v562, %v561
    %v564 = vextract.low.u32 %v563
    %v565 = vextract.high.u32 %v563
    %v566 = vmul.u32.u64.compose %v562, %v557
    %v567 = vextract.low.u32 %v566
    %v568 = vextract.high.u32 %v566
    %v569 = vmul.u32 %v562, %v553
    %v570 = vadd.s32 %v565, %v567
    %vm571 = vc.u32 %v565, %v567
    %v572 = vadd.s32 %v568, 1
    %v573 = vsel %vm571, %v572, %v568
    %v574 = vadd.s32 %v569, %v573
    %v575 = vadd.s32 %v574, 536870912
    %v576 = vshrl.u32 %v575, 30
    %v577 = vshll.u32 %v576, 30
    %v578 = vsub.s32 %v574, %v577
    %vm579 = vcmp.lt.s32.totalorder %v578, 0
    %v580 = vsub.s32 0, %v578
    %v581 = vsel %vm579, %v580, %v578
    %v582 = vclz %v581
    %v583 = vsub.s32 %v582, 2
    %vm584 = vcmp.gt.s32.totalorder 0, %v583
    %v585 = vsel %vm584, 0, %v583
    %v586 = vsub.s32 32, %v585
    %v587 = vshll.u32 %v578, %v585
    %v588 = vshrl.u32 %v570, %v586
    %v589 = vor.u32 %v587, %v588
    %v590 = vsub.s32 4294967266, %v585
    %v591 = vadd.s32 %v590, 127
    %v592 = vshll.u32 %v591, 23
    %v593 = vor.u32 4788187, %v592
    %v594 = vand.u32 2147483647, %v593
    %v596 = vcvt.s32.f32 %v589
    %v597 = vmul.f32 %v596, %v594
    %v598 = vxor.u32 %v597, 2147483648
    %v599 = vsel %vm516, %v598, %v597
    %v600 = vsub.s32 4, %v576
    %v601 = vsel %vm516, %v600, %v576
    %v602 = vsel %vm515, %v306, %v599
    %v603 = vsel %vm515, 0, %v601
    %v604 = vcosq.f32.pop %v602
    %v605 = vsinq.f32.pop %v602
    %vm606 = vweird.f32 %v306
    %v607 = vand.u32 %v603, 3
    %vm608 = vcmp.lt.s32.totalorder %v607, 2
    %vm609 = vcmp.eq.s32.totalorder %v607, 0
    %v610 = vxor.u32 %v605, 2147483648
    %v611 = vsel %vm609, %v604, %v610
    %vm612 = vcmp.eq.s32.totalorder %v607, 2
    %v613 = vxor.u32 %v604, 2147483648
    %v614 = vsel %vm612, %v613, %v605
    %v615 = vsel %vm608, %v611, %v614
    %v616 = vsel %vm606, nan, %v615
    %v617 = vand.u32 2147483647, %v307
    %vm618 = vcmp.le.f32.partialorder %v617, 0.7853982
    %vm619 = vcmp.lt.s32.totalorder %v307, 0
    %v620 = vand.u32 %v307, 2139095040
    %v621 = vshrl.u32 %v620, 23
    %v622 = vsub.s32 %v621, 127
    %v623 = vand.u32 2147483647, %v307
    %v624 = vand.u32 %v623, 8388607
    %v625 = vor.u32 %v624, 8388608
    %v626 = vsub.s32 0, %v625
    %v627 = vadd.s32 %v622, 1
    %vm628 = vcmp.gt.s32.totalorder %v627, 0
    %v629 = vsel %vm628, %v627, 0
    %v630 = vshrl.u32 %v629, 5
    %v631 = vand.u32 %v629, 31
    %v632 = vsub.s32 32, %v631
    %v633 = vshrl.u32 683565275, %v632
    %v634 = vshll.u32 683565275, %v631
    %v635 = vshrl.u32 2475754826, %v632
    %v636 = vor.u32 %v634, %v635
    %v637 = vshll.u32 2475754826, %v631
    %v638 = vshrl.u32 2131351028, %v632
    %v639 = vor.u32 %v637, %v638
    %v640 = vshll.u32 2131351028, %v631
    %v641 = vshrl.u32 2102212464, %v632
    %v642 = vor.u32 %v640, %v641
    %v643 = vshll.u32 2102212464, %v631
    %v644 = vshrl.u32 920167782, %v632
    %v645 = vor.u32 %v643, %v644
    %v646 = vshll.u32 920167782, %v631
    %v647 = vshrl.u32 1326507024, %v632
    %v648 = vor.u32 %v646, %v647
    %vm649 = vcmp.lt.s32.totalorder %v630, 1
    %vm650 = vcmp.lt.s32.totalorder %v630, 2
    %vm651 = vcmp.lt.s32.totalorder %v630, 3
    %vm652 = vcmp.lt.s32.totalorder %v630, 4
    %v653 = vsel %vm649, %v633, %v636
    %v654 = vsel %vm652, %v642, 2102212464
    %v655 = vsel %vm651, %v639, %v654
    %v656 = vsel %vm650, %v653, %v655
    %v657 = vsel %vm649, %v636, %v639
    %v658 = vsel %vm652, %v645, 920167782
    %v659 = vsel %vm651, %v642, %v658
    %v660 = vsel %vm650, %v657, %v659
    %v661 = vsel %vm649, %v639, %v642
    %v662 = vsel %vm652, %v648, 1326507024
    %v663 = vsel %vm651, %v645, %v662
    %v664 = vsel %vm650, %v661, %v663
    %v665 = vshll.u32 %v625, 8
    %v666 = vmul.u32.u64.compose %v665, %v664
    %v667 = vextract.low.u32 %v666
    %v668 = vextract.high.u32 %v666
    %v669 = vmul.u32.u64.compose %v665, %v660
    %v670 = vextract.low.u32 %v669
    %v671 = vextract.high.u32 %v669
    %v672 = vmul.u32 %v665, %v656
    %v673 = vadd.s32 %v668, %v670
    %vm674 = vc.u32 %v668, %v670
    %v675 = vadd.s32 %v671, 1
    %v676 = vsel %vm674, %v675, %v671
    %v677 = vadd.s32 %v672, %v676
    %v678 = vadd.s32 %v677, 536870912
    %v679 = vshrl.u32 %v678, 30
    %v680 = vshll.u32 %v679, 30
    %v681 = vsub.s32 %v677, %v680
    %vm682 = vcmp.lt.s32.totalorder %v681, 0
    %v683 = vsub.s32 0, %v681
    %v684 = vsel %vm682, %v683, %v681
    %v685 = vclz %v684
    %v686 = vsub.s32 %v685, 2
    %vm687 = vcmp.gt.s32.totalorder 0, %v686
    %v688 = vsel %vm687, 0, %v686
    %v689 = vsub.s32 32, %v688
    %v690 = vshll.u32 %v681, %v688
    %v691 = vshrl.u32 %v673, %v689
    %v692 = vor.u32 %v690, %v691
    %v693 = vsub.s32 4294967266, %v688
    %v694 = vadd.s32 %v693, 127
    %v695 = vshll.u32 %v694, 23
    %v696 = vor.u32 4788187, %v695
    %v697 = vand.u32 2147483647, %v696
    %v699 = vcvt.s32.f32 %v692
    %v700 = vmul.f32 %v699, %v697
    %v701 = vxor.u32 %v700, 2147483648
    %v702 = vsel %vm619, %v701, %v700
    %v703 = vsub.s32 4, %v679
    %v704 = vsel %vm619, %v703, %v679
    %v705 = vsel %vm618, %v307, %v702
    %v706 = vsel %vm618, 0, %v704
    %v707 = vcosq.f32.pop %v705
    %v708 = vsinq.f32.pop %v705
    %vm709 = vweird.f32 %v307
    %v710 = vand.u32 %v706, 3
    %vm711 = vcmp.lt.s32.totalorder %v710, 2
    %vm712 = vcmp.eq.s32.totalorder %v710, 0
    %v713 = vxor.u32 %v708, 2147483648
    %v714 = vsel %vm712, %v707, %v713
    %vm715 = vcmp.eq.s32.totalorder %v710, 2
    %v716 = vxor.u32 %v707, 2147483648
    %v717 = vsel %vm715, %v716, %v708
    %v718 = vsel %vm711, %v714, %v717
    %v719 = vsel %vm709, nan, %v718
    %v720 = vmul.f32 %v282, %v410
    %v721 = vmul.f32 %v289, %v513
    %v722 = vmul.f32 %v296, %v616
    %v723 = vmul.f32 %v303, %v719
    %v724 = vld [vmem:[#allocation3] sm:$0xff]
    %v725 = vld [vmem:[#allocation3 + $0x8] sm:$0xff]
    %v726 = vmul.f32 %v724, 0.1
    %v727 = vmul.f32 %v725, 0.1
    %v730 = vcombine.high %v726, %v726
    %v731 = vcombine.high %v727, %v727
    %v734 = vmul.f32 %v720, %v726
    %v735 = vmul.f32 %v721, %v730
    %v736 = vmul.f32 %v722, %v727
    %v737 = vmul.f32 %v723, %v731
    %v742 = vcombine.low %v734, %v735
    %v743 = vcombine.low %v736, %v737
    %v746 = vadd.f32 %v724, %v742
    %v747 = vadd.f32 %v725, %v743
    %748 = vst [vmem:[#allocation6] sm:$0xff] %v746
    %749 = vst [vmem:[#allocation6 + $0x8] sm:$0xff] %v747
    // Predicated region
    $region14: #{tpu_custom_call.1} parent=1 // pred_check
      _
    $region15: #{tpu_custom_call.1} parent=1 // pred_check_branch
      %751 = sbr.rel (0) target = $region17
    $region16: #{tpu_custom_call.1} parent=1 // pred_region
      %s753 = ssub.s32 256, 256
      %754 = vsyncadd [#allocation5], %s753
      %s756 = sshll.u32 [#allocation6], 4
      %s757 = int_to_ptr.vmem [resolvable:$true] %s756
      %759 = dma.vmem_to_hbm [thread:$0]  %s757, 256, %s2, [#allocation5]
    $region17: #{tpu_custom_call.1} parent=1 // pred_fallthru
      _
    // Predicated region
    $region18: #{tpu_custom_call.1} parent=1 // pred_check
      _
    $region19: #{tpu_custom_call.1} parent=1 // pred_check_branch
      %761 = sbr.rel (0) target = $region21
    $region20: #{tpu_custom_call.1} parent=1 // pred_region
      %762 = dma.done [#allocation5], 256
    $region21: #{tpu_custom_call.1} parent=1 // pred_fallthru
      _
    %763 = vsyncpa [#allocation4], 1
    %764 = vsyncpa [#allocation5], 1

</llo_original>
